<compile_context>
chip_gen: v5e
topology: v5e:2x2
jax: 0.10.0
libtpu: 0.0.40
codegen_flags: <defaults>
</compile_context>

<pallas_src>
import functools

import jax
import jax.numpy as jnp
from jax import lax
from jax.experimental import pallas as pl
from jax.experimental.pallas import tpu as pltpu

_LANES = 128  # one 128-lane tile per fused-weight group and for the output slab


# --------------------------------------------------------------------------
# Kernel
# --------------------------------------------------------------------------
def _capsnet_kernel(x_ref, wfc_ref, bfc_ref, wall_ref, out_ref, *, meta):
    cp, dp, cc, dc, cr, dr = meta
    off_c = cp * dp                      # cam transform lane start
    off_r = off_c + cc * dc              # presence transform lane start
    n_t = off_r + cr * dr                # total transform lanes (<= 128)
    lp = n_t                             # pose routing logits (group A lanes)
    lc = lp + cp
    lr = lc + cc
    le = lr + cr                         # end of routing logits

    # ---- fc + relu -------------------------------------------------------
    h = jnp.dot(x_ref[...], wfc_ref[...], preferred_element_type=jnp.float32)
    h = jnp.maximum(h + bfc_ref[...], 0.0)                        # [TB, H]

    # ---- ONE fused matmul, N = 256 = two 128-lane groups -------------------
    #   group A (lanes   0..127): transforms | unreplicated routing logits | 0
    #   group B (lanes 128..255): routing logits replicated per output dim,
    #                             lane-aligned with their transform columns.
    y = jnp.dot(h, wall_ref[...], preferred_element_type=jnp.float32)  # [TB,256]
    y_t = y[:, :_LANES]        # tile-aligned slice: transforms + logits
    y_r = y[:, _LANES:]        # replicated logits, same lane offsets as y_t

    tb = y_t.shape[0]
    lane = lax.broadcasted_iota(jnp.int32, (tb, _LANES), 1)
    neg = jnp.float32(-1e30)

    # Per-capsule-layer softmax statistics (max & exact 1/denominator).
    def stats(lo, hi):
        msk = (lane >= lo) & (lane < hi)
        lgt = jnp.where(msk, y_t, neg)
        m = jnp.max(lgt, axis=1, keepdims=True)
        s = jnp.sum(jnp.exp(lgt - m), axis=1, keepdims=True)
        return m, 1.0 / s      # exact divide (correctness vs reference)

    m_p, i_p = stats(lp, lc)
    m_c, i_c = stats(lc, lr)
    m_r, i_r = stats(lr, le)

    # Broadcast each layer's (max, 1/denom) to that layer's transform lanes.
    m_all = jnp.where(lane < off_c, m_p, jnp.where(lane < off_r, m_c, m_r))
    i_all = jnp.where(lane < off_c, i_p, jnp.where(lane < off_r, i_c, i_r))

    att = jnp.exp(jnp.where(lane < n_t, y_r, m_all) - m_all) * i_all
    # Single lane-dense, unmasked 128-wide store per batch tile.
    out_ref[...] = jnp.where(lane < n_t, att * y_t, 0.0)


# --------------------------------------------------------------------------
# One-time parameter layout prep (parameter-load time, outside the hot path)
# --------------------------------------------------------------------------
def prepare_params(params):
    fc_w = jnp.asarray(params["fc_w"], jnp.float32)      # [H, F]
    fc_b = jnp.asarray(params["fc_b"], jnp.float32)      # [H]
    wp = jnp.asarray(params["pose_W"], jnp.float32)      # [Cp, H, Dp]
    wc = jnp.asarray(params["cam_W"], jnp.float32)
    wr = jnp.asarray(params["pres_W"], jnp.float32)
    rp = jnp.asarray(params["pose_route"], jnp.float32)  # [Cp, H]
    rc = jnp.asarray(params["cam_route"], jnp.float32)
    rr = jnp.asarray(params["pres_route"], jnp.float32)

    H = fc_w.shape[0]
    Cp, _, Dp = wp.shape
    Cc, _, Dc = wc.shape
    Cr, _, Dr = wr.shape

    n_t = Cp * Dp + Cc * Dc + Cr * Dr
    n_l = Cp + Cc + Cr
    assert n_t + n_l <= _LANES, "fused layout needs transforms+logits <= 128 lanes"

    def flat_w(W):                 # [C, H, D] -> [H, C*D], col c*D+d = W[c,:,d]
        C, H_, D = W.shape
        return jnp.transpose(W, (1, 0, 2)).reshape(H_, C * D)

    def rep_route(R, D):           # [C, H] -> [H, C*D], col c*D+d = R[c,:]
        return jnp.repeat(R.T, D, axis=1)

    group_a = jnp.concatenate(
        [flat_w(wp), flat_w(wc), flat_w(wr), rp.T, rc.T, rr.T], axis=1)
    group_a = jnp.pad(group_a, ((0, 0), (0, _LANES - group_a.shape[1])))

    group_b = jnp.concatenate(
        [rep_route(rp, Dp), rep_route(rc, Dc), rep_route(rr, Dr)], axis=1)
    group_b = jnp.pad(group_b, ((0, 0), (0, _LANES - group_b.shape[1])))

    prep = {
        "wfc_t": fc_w.T,                        # [F, H]
        "bfc": fc_b.reshape(1, H),              # [1, H]
        "w_all": jnp.concatenate([group_a, group_b], axis=1),   # [H, 256]
    }
    meta = (int(Cp), int(Dp), int(Cc), int(Dc), int(Cr), int(Dr))
    return prep, meta


def _round_up(v, m):
    return ((v + m - 1) // m) * m


# --------------------------------------------------------------------------
# Forward wrapper
# --------------------------------------------------------------------------
@functools.partial(jax.jit, static_argnames=("meta",))
def capsule_network_forward(x, prep, *, meta):
    Cp, Dp, Cc, Dc, Cr, Dr = meta
    wfc_t, bfc, w_all = prep["wfc_t"], prep["bfc"], prep["w_all"]
    B, F = x.shape
    H = wfc_t.shape[1]
    N_all = w_all.shape[1]

    # Batch tiling: sublane-aligned, large tiles (memory-bound streaming op),
    # and >=2 grid steps when the batch allows it (v7x dual-TC sharding).
    B8 = _round_up(B, 8)
    if B8 <= 8:
        TB = 8
    else:
        TB = min(512, _round_up((B8 + 1) // 2, 8))
    Bp = _round_up(B, TB)
    if Bp != B:
        x = jnp.pad(x, ((0, Bp - B), (0, 0)))
    grid = (Bp // TB,)

    const2 = lambda i: (0, 0)                       # weights resident across tiles
    row_tiled = lambda ncols: pl.BlockSpec((TB, ncols), lambda i: (i, 0))

    # Raise scoped VMEM only if the double-buffered footprint gets close to
    # v5e's 16 MiB default (only relevant at much larger F/H/TB than the demo).
    est_bytes = 4 * (2 * TB * (F + _LANES) + 2 * (F * H + H + H * N_all))
    vmem_limit = None
    if est_bytes > 12 * 1024 * 1024:
        vmem_limit = int(min(2 * est_bytes, 48 * 1024 * 1024))

    out_f = pl.pallas_call(
        functools.partial(_capsnet_kernel, meta=meta),
        out_shape=jax.ShapeDtypeStruct((Bp, _LANES), jnp.float32),
        grid=grid,
        in_specs=[
            row_tiled(F),                           # x (batch-tiled)
            pl.BlockSpec((F, H), const2),           # fc weight (pre-transposed)
            pl.BlockSpec((1, H), const2),           # fc bias
            pl.BlockSpec((H, N_all), const2),       # fused second-stage weights
        ],
        out_specs=row_tiled(_LANES),                # single lane-dense slab
        compiler_params=pltpu.CompilerParams(
            dimension_semantics=("parallel",),
            vmem_limit_bytes=vmem_limit),
    )(x, wfc_t, bfc, w_all)

    # Glue: drop batch padding, slice the three column ranges, un-flatten.
    o_p = Cp * Dp
    o_c = o_p + Cc * Dc
    o_r = o_c + Cr * Dr
    pose_caps = out_f[:B, :o_p].reshape(B, Cp, Dp)
    camera_caps = out_f[:B, o_p:o_c].reshape(B, Cc, Dc)
    presence_caps = out_f[:B, o_c:o_r].reshape(B, Cr, Dr)
    return pose_caps, camera_caps, presence_caps


# --------------------------------------------------------------------------
# Pure-JAX reference (mirrors the PyTorch module exactly)
# --------------------------------------------------------------------------
def _reference_forward(x, params):
    h = jax.nn.relu(x @ params["fc_w"].T + params["fc_b"])

    def caps_layer(h, route_w, W):
        att = jax.nn.softmax(h @ route_w.T, axis=1)            # [B, C]
        transformed = jnp.einsum("bh,chd->bcd", h, W)          # [B, C, D]
        return att[:, :, None] * transformed

    return (caps_layer(h, params["pose_route"], params["pose_W"]),
            caps_layer(h, params["cam_route"], params["cam_W"]),
            caps_layer(h, params["pres_route"], params["pres_W"]))


def _init_params(key, in_features, hidden, num_pose, num_cam, num_pres,
                 pose_dim, cam_dim, pres_dim):
    ks = jax.random.split(key, 8)
    return {
        "fc_w": jax.random.normal(ks[0], (hidden, in_features), jnp.float32) * 0.1,
        "fc_b": jax.random.normal(ks[1], (hidden,), jnp.float32) * 0.1,
        "pose_route": jax.random.normal(ks[2], (num_pose, hidden), jnp.float32),
        "pose_W": jax.random.normal(ks[3], (num_pose, hidden, pose_dim), jnp.float32),
        "cam_route": jax.random.normal(ks[4], (num_cam, hidden), jnp.float32),
        "cam_W": jax.random.normal(ks[5], (num_cam, hidden, cam_dim), jnp.float32),
        "pres_route": jax.random.normal(ks[6], (num_pres, hidden), jnp.float32),
        "pres_W": jax.random.normal(ks[7], (num_pres, hidden, pres_dim), jnp.float32),
    }


if __name__ == "__main__":
    B = 2
    in_features = 32
    hidden = 64
    num_pose, num_cam, num_pres = 4, 3, 2
    pose_dim, cam_dim, pres_dim = 6, 7, 4

    key = jax.random.PRNGKey(0)
    kx, kp = jax.random.split(key)
    x = jax.random.normal(kx, (B, in_features), jnp.float32)
    params = _init_params(kp, in_features, hidden, num_pose, num_cam, num_pres,
                          pose_dim, cam_dim, pres_dim)

    # One-time layout prep (parameter-load time), then the hot-path call.
    prep, meta = prepare_params(params)
    outs = capsule_network_forward(x, prep, meta=meta)
    outs = jax.block_until_ready(outs)

    refs = _reference_forward(x, params)
    for o, r in zip(outs, refs):
        assert o.shape == r.shape, (o.shape, r.shape)
        assert jnp.allclose(o, r, rtol=2e-3, atol=2e-3), "mismatch vs reference"

    print("KERNEL_OK")
</pallas_src>

<mosaic_0001>
module attributes {stable_mosaic.version = 11 : i64} {
  func.func @_capsnet_kernel(%arg0: i32, %arg1: memref<8x32xf32, #tpu.memory_space<vmem>>, %arg2: memref<32x64xf32, #tpu.memory_space<vmem>>, %arg3: memref<1x64xf32, #tpu.memory_space<vmem>>, %arg4: memref<64x256xf32, #tpu.memory_space<vmem>>, %arg5: memref<8x128xf32, #tpu.memory_space<vmem>>) attributes {dimension_semantics = [#tpu.dimension_semantics<parallel>], iteration_bounds = array<i64: 1>, scalar_prefetch = 0 : i64, scratch_operands = 0 : i64, tpu.core_type = #tpu.core_type<tc>, window_params = [{transform_indices = @transform_0, window_bounds = array<i64: 8, 32>}, {pipeline_mode = #tpu.pipeline_mode<synchronous>, transform_indices = @transform_1, window_bounds = array<i64: 32, 64>}, {pipeline_mode = #tpu.pipeline_mode<synchronous>, transform_indices = @transform_2, window_bounds = array<i64: 1, 64>}, {pipeline_mode = #tpu.pipeline_mode<synchronous>, transform_indices = @transform_3, window_bounds = array<i64: 64, 256>}, {transform_indices = @transform_4, window_bounds = array<i64: 8, 128>}]} {
    %c0 = arith.constant 0 : index
    %c0_0 = arith.constant 0 : index
    %0 = vector.load %arg1[%c0, %c0_0] : memref<8x32xf32, #tpu.memory_space<vmem>>, vector<8x32xf32>
    %c0_1 = arith.constant 0 : index
    %c0_2 = arith.constant 0 : index
    %1 = vector.load %arg2[%c0_1, %c0_2] : memref<32x64xf32, #tpu.memory_space<vmem>>, vector<32x64xf32>
    %cst = arith.constant dense<0.000000e+00> : vector<8x64xf32>
    %2 = tpu.matmul %0, %1, %cst {dimension_numbers = #tpu.dot_dimension_numbers<[1], [0], [0], [1], [0, 0, 1, 1], [], []>} : vector<8x32xf32>, vector<32x64xf32>, vector<8x64xf32> -> vector<8x64xf32>
    %c0_3 = arith.constant 0 : index
    %c0_4 = arith.constant 0 : index
    %3 = vector.load %arg3[%c0_3, %c0_4] : memref<1x64xf32, #tpu.memory_space<vmem>>, vector<1x64xf32>
    %4 = vector.broadcast %3 : vector<1x64xf32> to vector<8x64xf32>
    %5 = arith.addf %2, %4 : vector<8x64xf32>
    %cst_5 = arith.constant 0.000000e+00 : f32
    %6 = vector.broadcast %cst_5 : f32 to vector<8x64xf32>
    %7 = arith.maximumf %5, %6 : vector<8x64xf32>
    %c0_6 = arith.constant 0 : index
    %c0_7 = arith.constant 0 : index
    %8 = vector.load %arg4[%c0_6, %c0_7] : memref<64x256xf32, #tpu.memory_space<vmem>>, vector<64x256xf32>
    %cst_8 = arith.constant dense<0.000000e+00> : vector<8x256xf32>
    %9 = tpu.matmul %7, %8, %cst_8 {dimension_numbers = #tpu.dot_dimension_numbers<[1], [0], [0], [1], [0, 0, 1, 1], [], []>} : vector<8x64xf32>, vector<64x256xf32>, vector<8x256xf32> -> vector<8x256xf32>
    %10 = vector.extract_strided_slice %9 {offsets = [0, 0], sizes = [8, 128], strides = [1, 1]} : vector<8x256xf32> to vector<8x128xf32>
    %11 = vector.extract_strided_slice %9 {offsets = [0, 128], sizes = [8, 128], strides = [1, 1]} : vector<8x256xf32> to vector<8x128xf32>
    %12 = tpu.iota {dimensions = array<i32: 1>} : vector<8x128xi32>
    %c53_i32 = arith.constant 53 : i32
    %13 = vector.broadcast %c53_i32 : i32 to vector<8x128xi32>
    %14 = arith.cmpi sge, %12, %13 : vector<8x128xi32>
    %c57_i32 = arith.constant 57 : i32
    %15 = vector.broadcast %c57_i32 : i32 to vector<8x128xi32>
    %16 = arith.cmpi slt, %12, %15 : vector<8x128xi32>
    %17 = arith.andi %14, %16 : vector<8x128xi1>
    %cst_9 = arith.constant -1.000000e+30 : f32
    %18 = vector.broadcast %cst_9 : f32 to vector<8x128xf32>
    %19 = arith.select %17, %10, %18 : vector<8x128xi1>, vector<8x128xf32>
    %cst_10 = arith.constant dense<0xFF800000> : vector<8xf32>
    %20 = vector.multi_reduction <maximumf>, %19, %cst_10 [1] : vector<8x128xf32> to vector<8xf32>
    %21 = vector.shape_cast %20 : vector<8xf32> to vector<8x1xf32>
    %22 = vector.broadcast %21 : vector<8x1xf32> to vector<8x128xf32>
    %23 = arith.subf %19, %22 : vector<8x128xf32>
    %24 = math.exp %23 : vector<8x128xf32>
    %cst_11 = arith.constant dense<0.000000e+00> : vector<8xf32>
    %25 = vector.multi_reduction <add>, %24, %cst_11 [1] : vector<8x128xf32> to vector<8xf32>
    %26 = vector.shape_cast %25 : vector<8xf32> to vector<8x1xf32>
    %cst_12 = arith.constant 1.000000e+00 : f32
    %27 = vector.broadcast %cst_12 : f32 to vector<8x1xf32>
    %28 = arith.divf %27, %26 : vector<8x1xf32>
    %c57_i32_13 = arith.constant 57 : i32
    %29 = vector.broadcast %c57_i32_13 : i32 to vector<8x128xi32>
    %30 = arith.cmpi sge, %12, %29 : vector<8x128xi32>
    %c60_i32 = arith.constant 60 : i32
    %31 = vector.broadcast %c60_i32 : i32 to vector<8x128xi32>
    %32 = arith.cmpi slt, %12, %31 : vector<8x128xi32>
    %33 = arith.andi %30, %32 : vector<8x128xi1>
    %cst_14 = arith.constant -1.000000e+30 : f32
    %34 = vector.broadcast %cst_14 : f32 to vector<8x128xf32>
    %35 = arith.select %33, %10, %34 : vector<8x128xi1>, vector<8x128xf32>
    %cst_15 = arith.constant dense<0xFF800000> : vector<8xf32>
    %36 = vector.multi_reduction <maximumf>, %35, %cst_15 [1] : vector<8x128xf32> to vector<8xf32>
    %37 = vector.shape_cast %36 : vector<8xf32> to vector<8x1xf32>
    %38 = vector.broadcast %37 : vector<8x1xf32> to vector<8x128xf32>
    %39 = arith.subf %35, %38 : vector<8x128xf32>
    %40 = math.exp %39 : vector<8x128xf32>
    %cst_16 = arith.constant dense<0.000000e+00> : vector<8xf32>
    %41 = vector.multi_reduction <add>, %40, %cst_16 [1] : vector<8x128xf32> to vector<8xf32>
    %42 = vector.shape_cast %41 : vector<8xf32> to vector<8x1xf32>
    %cst_17 = arith.constant 1.000000e+00 : f32
    %43 = vector.broadcast %cst_17 : f32 to vector<8x1xf32>
    %44 = arith.divf %43, %42 : vector<8x1xf32>
    %c60_i32_18 = arith.constant 60 : i32
    %45 = vector.broadcast %c60_i32_18 : i32 to vector<8x128xi32>
    %46 = arith.cmpi sge, %12, %45 : vector<8x128xi32>
    %c62_i32 = arith.constant 62 : i32
    %47 = vector.broadcast %c62_i32 : i32 to vector<8x128xi32>
    %48 = arith.cmpi slt, %12, %47 : vector<8x128xi32>
    %49 = arith.andi %46, %48 : vector<8x128xi1>
    %cst_19 = arith.constant -1.000000e+30 : f32
    %50 = vector.broadcast %cst_19 : f32 to vector<8x128xf32>
    %51 = arith.select %49, %10, %50 : vector<8x128xi1>, vector<8x128xf32>
    %cst_20 = arith.constant dense<0xFF800000> : vector<8xf32>
    %52 = vector.multi_reduction <maximumf>, %51, %cst_20 [1] : vector<8x128xf32> to vector<8xf32>
    %53 = vector.shape_cast %52 : vector<8xf32> to vector<8x1xf32>
    %54 = vector.broadcast %53 : vector<8x1xf32> to vector<8x128xf32>
    %55 = arith.subf %51, %54 : vector<8x128xf32>
    %56 = math.exp %55 : vector<8x128xf32>
    %cst_21 = arith.constant dense<0.000000e+00> : vector<8xf32>
    %57 = vector.multi_reduction <add>, %56, %cst_21 [1] : vector<8x128xf32> to vector<8xf32>
    %58 = vector.shape_cast %57 : vector<8xf32> to vector<8x1xf32>
    %cst_22 = arith.constant 1.000000e+00 : f32
    %59 = vector.broadcast %cst_22 : f32 to vector<8x1xf32>
    %60 = arith.divf %59, %58 : vector<8x1xf32>
    %c24_i32 = arith.constant 24 : i32
    %61 = vector.broadcast %c24_i32 : i32 to vector<8x128xi32>
    %62 = arith.cmpi slt, %12, %61 : vector<8x128xi32>
    %c45_i32 = arith.constant 45 : i32
    %63 = vector.broadcast %c45_i32 : i32 to vector<8x128xi32>
    %64 = arith.cmpi slt, %12, %63 : vector<8x128xi32>
    %65 = vector.shape_cast %37 : vector<8x1xf32> to vector<8x1xf32>
    %66 = vector.broadcast %65 : vector<8x1xf32> to vector<8x128xf32>
    %67 = vector.shape_cast %53 : vector<8x1xf32> to vector<8x1xf32>
    %68 = vector.broadcast %67 : vector<8x1xf32> to vector<8x128xf32>
    %69 = arith.select %64, %66, %68 : vector<8x128xi1>, vector<8x128xf32>
    %70 = vector.shape_cast %21 : vector<8x1xf32> to vector<8x1xf32>
    %71 = vector.broadcast %70 : vector<8x1xf32> to vector<8x128xf32>
    %72 = arith.select %62, %71, %69 : vector<8x128xi1>, vector<8x128xf32>
    %c24_i32_23 = arith.constant 24 : i32
    %73 = vector.broadcast %c24_i32_23 : i32 to vector<8x128xi32>
    %74 = arith.cmpi slt, %12, %73 : vector<8x128xi32>
    %c45_i32_24 = arith.constant 45 : i32
    %75 = vector.broadcast %c45_i32_24 : i32 to vector<8x128xi32>
    %76 = arith.cmpi slt, %12, %75 : vector<8x128xi32>
    %77 = vector.shape_cast %44 : vector<8x1xf32> to vector<8x1xf32>
    %78 = vector.broadcast %77 : vector<8x1xf32> to vector<8x128xf32>
    %79 = vector.shape_cast %60 : vector<8x1xf32> to vector<8x1xf32>
    %80 = vector.broadcast %79 : vector<8x1xf32> to vector<8x128xf32>
    %81 = arith.select %76, %78, %80 : vector<8x128xi1>, vector<8x128xf32>
    %82 = vector.shape_cast %28 : vector<8x1xf32> to vector<8x1xf32>
    %83 = vector.broadcast %82 : vector<8x1xf32> to vector<8x128xf32>
    %84 = arith.select %74, %83, %81 : vector<8x128xi1>, vector<8x128xf32>
    %c53_i32_25 = arith.constant 53 : i32
    %85 = vector.broadcast %c53_i32_25 : i32 to vector<8x128xi32>
    %86 = arith.cmpi slt, %12, %85 : vector<8x128xi32>
    %87 = arith.select %86, %11, %72 : vector<8x128xi1>, vector<8x128xf32>
    %88 = arith.subf %87, %72 : vector<8x128xf32>
    %89 = math.exp %88 : vector<8x128xf32>
    %90 = arith.mulf %89, %84 : vector<8x128xf32>
    %c53_i32_26 = arith.constant 53 : i32
    %91 = vector.broadcast %c53_i32_26 : i32 to vector<8x128xi32>
    %92 = arith.cmpi slt, %12, %91 : vector<8x128xi32>
    %93 = arith.mulf %90, %10 : vector<8x128xf32>
    %cst_27 = arith.constant 0.000000e+00 : f32
    %94 = vector.broadcast %cst_27 : f32 to vector<8x128xf32>
    %95 = arith.select %92, %93, %94 : vector<8x128xi1>, vector<8x128xf32>
    %c0_28 = arith.constant 0 : index
    %c0_29 = arith.constant 0 : index
    %96 = vector.load %arg5[%c0_28, %c0_29] : memref<8x128xf32, #tpu.memory_space<vmem>>, vector<8x128xf32>
    tpu.vector_store %arg5[%c0_28, %c0_29], %95 {strides = array<i32>} : memref<8x128xf32, #tpu.memory_space<vmem>>, vector<8x128xf32>,
    return
  }
  func.func @transform_0(%arg0: i32) -> (i32, i32) {
    %c0_i32 = arith.constant 0 : i32
    %c0_i32_0 = arith.constant 0 : i32
    return %arg0, %c0_i32 : i32, i32
  }
  func.func @transform_1(%arg0: i32) -> (i32, i32) {
    %c0_i32 = arith.constant 0 : i32
    %c0_i32_0 = arith.constant 0 : i32
    %c0_i32_1 = arith.constant 0 : i32
    return %c0_i32, %c0_i32_0 : i32, i32
  }
  func.func @transform_2(%arg0: i32) -> (i32, i32) {
    %c0_i32 = arith.constant 0 : i32
    %c0_i32_0 = arith.constant 0 : i32
    %c0_i32_1 = arith.constant 0 : i32
    return %c0_i32, %c0_i32_0 : i32, i32
  }
  func.func @transform_3(%arg0: i32) -> (i32, i32) {
    %c0_i32 = arith.constant 0 : i32
    %c0_i32_0 = arith.constant 0 : i32
    %c0_i32_1 = arith.constant 0 : i32
    return %c0_i32, %c0_i32_0 : i32, i32
  }
  func.func @transform_4(%arg0: i32) -> (i32, i32) {
    %c0_i32 = arith.constant 0 : i32
    %c0_i32_0 = arith.constant 0 : i32
    return %arg0, %c0_i32 : i32, i32
  }
}

</mosaic_0001>

<llo_original>
// kernel: capsule_network_forward.1
$region0: #{capsule_network_forward.1}
  #allocation0 [shape = 'u32[]', space=smem, size = 0x4, offset = 0x4, fixed_abs, tag = 'smem constant byte address 0x4 - core index']
  #allocation1 [shape = 'u32[72,128]{1,0:T(1,128)}', space=vmem, size = 0x9000, scoped, tag = 'internal scratch']
  %s0 = inlined_call_operand.vmem [shape: f32[8,32], index: 0, kind: input, shape index: {}]
  %s1 = inlined_call_operand.hbm [shape: f32[32,64], index: 1, kind: input, shape index: {}]
  %s2 = inlined_call_operand.vmem [shape: f32[1,64], index: 2, kind: input, shape index: {}]
  %s3 = inlined_call_operand.hbm [shape: f32[64,256], index: 3, kind: input, shape index: {}]
  %s4 = inlined_call_operand.vmem [shape: f32[8,128], index: 4, kind: output, shape index: {}]
  %s5 = sld [smem:[#allocation0]]
  $region34: #{capsule_network_forward.1} parent=0
    _
  %s7 = ssub.s32 1, %s5
  %s8 = scalar_select 0, %s7, %s5
  $region1: #{capsule_network_forward.1} parent=0
    #allocation2 [shape = 'u8[16384]{0}', space=vmem, size = 0x4000, scoped, tag = 'input window, operand 1, single buffered']
    #allocation3 [shape = 's32[1]{0}', space=sflag, size = 0x4, scoped, tag = 'scoped memory for capsule_network_forward.1']
    #allocation4 [shape = 'u8[65536]{0}', space=vmem, size = 0x10000, scoped, tag = 'input window, operand 3, single buffered']
    #allocation5 [shape = 's32[1]{0}', space=sflag, size = 0x4, scoped, tag = 'scoped memory for capsule_network_forward.1']
    %9 = vsyncpa [#allocation3], 0
    %10 = vsyncpa [#allocation5], 0
    // Predicated region
    $region2: #{capsule_network_forward.1} parent=1 // pred_check
      _
    $region3: #{capsule_network_forward.1} parent=1 // pred_check_branch
      %12 = sbr.rel (0) target = $region5
    $region4: #{capsule_network_forward.1} parent=1 // pred_region
      _
    $region5: #{capsule_network_forward.1} parent=1 // pred_fallthru
      _
    // Predicated region
    $region6: #{capsule_network_forward.1} parent=1 // pred_check
      _
    $region7: #{capsule_network_forward.1} parent=1 // pred_check_branch
      %14 = sbr.rel (0) target = $region9
    $region8: #{capsule_network_forward.1} parent=1 // pred_region
      %16 = vsyncadd [#allocation3], 0
      %s17 = sshll.u32 %s1, 4
      %s18 = int_to_ptr.hbm [resolvable:$true] %s17
      %s19 = sshll.u32 [#allocation2], 4
      %s20 = int_to_ptr.vmem [resolvable:$true] %s19
      %25 = dma.hbm_to_vmem [thread:$0]  %s18, 512, %s20, [#allocation3], 128, 128, 8
    $region9: #{capsule_network_forward.1} parent=1 // pred_fallthru
      _
    // Predicated region
    $region10: #{capsule_network_forward.1} parent=1 // pred_check
      _
    $region11: #{capsule_network_forward.1} parent=1 // pred_check_branch
      %27 = sbr.rel (0) target = $region13
    $region12: #{capsule_network_forward.1} parent=1 // pred_region
      _
    $region13: #{capsule_network_forward.1} parent=1 // pred_fallthru
      _
    // Predicated region
    $region14: #{capsule_network_forward.1} parent=1 // pred_check
      _
    $region15: #{capsule_network_forward.1} parent=1 // pred_check_branch
      %29 = sbr.rel (0) target = $region17
    $region16: #{capsule_network_forward.1} parent=1 // pred_region
      %31 = vsyncadd [#allocation5], 0
      %s32 = sshll.u32 %s3, 4
      %s33 = int_to_ptr.hbm [resolvable:$true] %s32
      %s34 = sshll.u32 [#allocation4], 4
      %s35 = int_to_ptr.vmem [resolvable:$true] %s34
      %40 = dma.hbm_to_vmem [thread:$0]  %s33, 2048, %s35, [#allocation5], 256, 256, 16
    $region17: #{capsule_network_forward.1} parent=1 // pred_fallthru
      _
    // Predicated region
    $region18: #{capsule_network_forward.1} parent=1 // pred_check
      _
    $region19: #{capsule_network_forward.1} parent=1 // pred_check_branch
      %42 = sbr.rel (0) target = $region21
    $region20: #{capsule_network_forward.1} parent=1 // pred_region
      %44 = dma.done [#allocation3], 512
    $region21: #{capsule_network_forward.1} parent=1 // pred_fallthru
      _
    // Predicated region
    $region22: #{capsule_network_forward.1} parent=1 // pred_check
      _
    $region23: #{capsule_network_forward.1} parent=1 // pred_check_branch
      %46 = sbr.rel (0) target = $region25
    $region24: #{capsule_network_forward.1} parent=1 // pred_region
      %48 = dma.done [#allocation5], 2048
    $region25: #{capsule_network_forward.1} parent=1 // pred_fallthru
      _
    %v49 = vld [vmem:[%s0] sm:$0xff]
    %v50 = vld [vmem:[#allocation2] sm:$0xff]
    %v51 = vld [vmem:[#allocation2 + $0x8] sm:$0xff]
    %v52 = vld [vmem:[#allocation2 + $0x10] sm:$0xff]
    %v53 = vld [vmem:[#allocation2 + $0x18] sm:$0xff]
    %v54 = vld [vmem:[%s2] sm:$0x1]
    %v56 = vperm.slane %v54, 0
    %vm58 = vcmask 261120
    %v60 = vsel %vm58, %v49, 0
    %62 = vmatpush.msra.mxu0 0.0
    %63 = vmatpush.msra.mxu0 0.0
    %64 = vmatpush.msra.mxu0 0.0
    %65 = vmatpush.msra.mxu0 0.0
    %66 = vmatpush.msra.mxu0 0.0
    %67 = vmatpush.msra.mxu0 0.0
    %68 = vmatpush.msra.mxu0 0.0
    %69 = vmatpush.msra.mxu0 0.0
    %70 = vmatpush.msra.mxu0 0.0
    %71 = vmatpush.msra.mxu0 0.0
    %72 = vmatpush.msra.mxu0 0.0
    %73 = vmatpush.msra.mxu0 0.0
    %74 = vmatpush.msra.mxu0 %v53
    %75 = vmatpush.msra.mxu0 %v52
    %76 = vmatpush.msra.mxu0 %v51
    %77 = vmatpush.msra.mxu0 %v50
    %78 = vmatmul.f32.gmra.mxu0 %v60
    %v79 = vpop.f32.mrf.mxu0
    %v80 = vadd.f32 %v56, %v79
    %81 = vdwg.mxu0
    %v82 = vmax.f32 %v80, 0.0
    %v83 = vld [vmem:[#allocation4] sm:$0xff]
    %v84 = vld [vmem:[#allocation4 + $0x8] sm:$0xff]
    %v85 = vld [vmem:[#allocation4 + $0x10] sm:$0xff]
    %v86 = vld [vmem:[#allocation4 + $0x18] sm:$0xff]
    %v87 = vld [vmem:[#allocation4 + $0x20] sm:$0xff]
    %v88 = vld [vmem:[#allocation4 + $0x28] sm:$0xff]
    %v89 = vld [vmem:[#allocation4 + $0x30] sm:$0xff]
    %v90 = vld [vmem:[#allocation4 + $0x38] sm:$0xff]
    %v91 = vld [vmem:[#allocation4 + $0x40] sm:$0xff]
    %v92 = vld [vmem:[#allocation4 + $0x48] sm:$0xff]
    %v93 = vld [vmem:[#allocation4 + $0x50] sm:$0xff]
    %v94 = vld [vmem:[#allocation4 + $0x58] sm:$0xff]
    %v95 = vld [vmem:[#allocation4 + $0x60] sm:$0xff]
    %v96 = vld [vmem:[#allocation4 + $0x68] sm:$0xff]
    %v97 = vld [vmem:[#allocation4 + $0x70] sm:$0xff]
    %v98 = vld [vmem:[#allocation4 + $0x78] sm:$0xff]
    %vm99 = vcmask 523264
    %v101 = vsel %vm99, %v82, 0
    %103 = vmatpush.msra.mxu0 0.0
    %104 = vmatpush.msra.mxu0 0.0
    %105 = vmatpush.msra.mxu0 0.0
    %106 = vmatpush.msra.mxu0 0.0
    %107 = vmatpush.msra.mxu0 0.0
    %108 = vmatpush.msra.mxu0 0.0
    %109 = vmatpush.msra.mxu0 0.0
    %110 = vmatpush.msra.mxu0 0.0
    %111 = vmatpush.msra.mxu0 %v97
    %112 = vmatpush.msra.mxu0 %v95
    %113 = vmatpush.msra.mxu0 %v93
    %114 = vmatpush.msra.mxu0 %v91
    %115 = vmatpush.msra.mxu0 %v89
    %116 = vmatpush.msra.mxu0 %v87
    %117 = vmatpush.msra.mxu0 %v85
    %118 = vmatpush.msra.mxu0 %v83
    %119 = vmatmul.f32.gmra.mxu0 %v101
    %v120 = vpop.f32.mrf.mxu0
    %v121 = vadd.f32 0.0, %v120
    %122 = vdwg.mxu0
    %123 = vmatpush.msra.mxu0 0.0
    %124 = vmatpush.msra.mxu0 0.0
    %125 = vmatpush.msra.mxu0 0.0
    %126 = vmatpush.msra.mxu0 0.0
    %127 = vmatpush.msra.mxu0 0.0
    %128 = vmatpush.msra.mxu0 0.0
    %129 = vmatpush.msra.mxu0 0.0
    %130 = vmatpush.msra.mxu0 0.0
    %131 = vmatpush.msra.mxu0 %v98
    %132 = vmatpush.msra.mxu0 %v96
    %133 = vmatpush.msra.mxu0 %v94
    %134 = vmatpush.msra.mxu0 %v92
    %135 = vmatpush.msra.mxu0 %v90
    %136 = vmatpush.msra.mxu0 %v88
    %137 = vmatpush.msra.mxu0 %v86
    %138 = vmatpush.msra.mxu0 %v84
    %139 = vmatmul.f32.gmra.mxu0 %v101
    %v140 = vpop.f32.mrf.mxu0
    %v141 = vadd.f32 0.0, %v140
    %142 = vdwg.mxu0
    %v143 = vlaneseq
    %v144 = vand.u32 %v143, 127
    %vm145 = vcmp.ge.s32.totalorder %v144, 53
    %vm146 = vcmp.lt.s32.totalorder %v144, 57
    %vm147 = vmand %vm145, %vm146
    %v148 = vsel %vm147, %v121, -1e+30
    %149 = vmax.xlane.f32.xlu0 %v148
    %v150 = vpop.xlane.xlu0 %149
    %v151 = vsub.f32 %v148, %v150
    %v152 = vmul.f32 %v151, 1.442695
    %v153 = vpow.pop %v152
    %154 = vadd.xlane.f32.xlu0 %v153
    %v155 = vpop.xlane.xlu0 %154
    %v156 = vrcp.pop %v155
    %v157 = vmul.f32 %v155, %v156
    %v158 = vsub.f32 1.0, %v157
    %v159 = vmul.f32 %v156, %v158
    %v160 = vadd.f32 %v156, %v159
    %vm161 = vweird.f32 %v155
    %vm162 = vweird.f32 %v156
    %vm163 = vmor %vm161, %vm162
    %v164 = vsel %vm163, %v156, %v160
    %v165 = vand.u32 2147483647, %v155
    %vm166 = vcmp.eq.f32.partialorder %v165, 8.507059e+37
    %v167 = vand.u32 %v155, 2147483648
    %v168 = vor.u32 1.1754944e-38, %v167
    %v169 = vsel %vm166, %v168, %v164
    %v170 = vmul.f32 1.0, %v169
    %vm171 = vcmp.ge.s32.totalorder %v144, 57
    %vm172 = vcmp.lt.s32.totalorder %v144, 60
    %vm173 = vmand %vm171, %vm172
    %v174 = vsel %vm173, %v121, -1e+30
    %175 = vmax.xlane.f32.xlu0 %v174
    %v176 = vpop.xlane.xlu0 %175
    %v177 = vsub.f32 %v174, %v176
    %v178 = vmul.f32 %v177, 1.442695
    %v179 = vpow.pop %v178
    %180 = vadd.xlane.f32.xlu0 %v179
    %v181 = vpop.xlane.xlu0 %180
    %v182 = vrcp.pop %v181
    %v183 = vmul.f32 %v181, %v182
    %v184 = vsub.f32 1.0, %v183
    %v185 = vmul.f32 %v182, %v184
    %v186 = vadd.f32 %v182, %v185
    %vm187 = vweird.f32 %v181
    %vm188 = vweird.f32 %v182
    %vm189 = vmor %vm187, %vm188
    %v190 = vsel %vm189, %v182, %v186
    %v191 = vand.u32 2147483647, %v181
    %vm192 = vcmp.eq.f32.partialorder %v191, 8.507059e+37
    %v193 = vand.u32 %v181, 2147483648
    %v194 = vor.u32 1.1754944e-38, %v193
    %v195 = vsel %vm192, %v194, %v190
    %v196 = vmul.f32 1.0, %v195
    %vm197 = vcmp.ge.s32.totalorder %v144, 60
    %vm198 = vcmp.lt.s32.totalorder %v144, 62
    %vm199 = vmand %vm197, %vm198
    %v200 = vsel %vm199, %v121, -1e+30
    %201 = vmax.xlane.f32.xlu0 %v200
    %v202 = vpop.xlane.xlu0 %201
    %v203 = vsub.f32 %v200, %v202
    %v204 = vmul.f32 %v203, 1.442695
    %v205 = vpow.pop %v204
    %206 = vadd.xlane.f32.xlu0 %v205
    %v207 = vpop.xlane.xlu0 %206
    %v208 = vrcp.pop %v207
    %v209 = vmul.f32 %v207, %v208
    %v210 = vsub.f32 1.0, %v209
    %v211 = vmul.f32 %v208, %v210
    %v212 = vadd.f32 %v208, %v211
    %vm213 = vweird.f32 %v207
    %vm214 = vweird.f32 %v208
    %vm215 = vmor %vm213, %vm214
    %v216 = vsel %vm215, %v208, %v212
    %v217 = vand.u32 2147483647, %v207
    %vm218 = vcmp.eq.f32.partialorder %v217, 8.507059e+37
    %v219 = vand.u32 %v207, 2147483648
    %v220 = vor.u32 1.1754944e-38, %v219
    %v221 = vsel %vm218, %v220, %v216
    %v222 = vmul.f32 1.0, %v221
    %vm223 = vcmp.lt.s32.totalorder %v144, 24
    %vm224 = vcmp.lt.s32.totalorder %v144, 45
    %v225 = vsel %vm224, %v176, %v202
    %v226 = vsel %vm223, %v150, %v225
    %v227 = vsel %vm224, %v196, %v222
    %v228 = vsel %vm223, %v170, %v227
    %vm229 = vcmp.lt.s32.totalorder %v144, 53
    %v230 = vsel %vm229, %v141, %v226
    %v231 = vsub.f32 %v230, %v226
    %v232 = vmul.f32 %v231, 1.442695
    %v233 = vpow.pop %v232
    %v234 = vmul.f32 %v233, %v228
    %v235 = vmul.f32 %v234, %v121
    %v236 = vsel %vm229, %v235, 0.0
    %237 = vst [vmem:[%s4] sm:$0xff] %v236
    // Predicated region
    $region26: #{capsule_network_forward.1} parent=1 // pred_check
      _
    $region27: #{capsule_network_forward.1} parent=1 // pred_check_branch
      %239 = sbr.rel (0) target = $region29
    $region28: #{capsule_network_forward.1} parent=1 // pred_region
      _
    $region29: #{capsule_network_forward.1} parent=1 // pred_fallthru
      _
    // Predicated region
    $region30: #{capsule_network_forward.1} parent=1 // pred_check
      _
    $region31: #{capsule_network_forward.1} parent=1 // pred_check_branch
      %241 = sbr.rel (0) target = $region33
    $region32: #{capsule_network_forward.1} parent=1 // pred_region
      _
    $region33: #{capsule_network_forward.1} parent=1 // pred_fallthru
      _
    %242 = vsyncpa [#allocation3], 1
    %243 = vsyncpa [#allocation5], 1

</llo_original>
